<compile_context>
chip_gen: v6e
topology: v6e:2x2x1
jax: 0.10.0
libtpu: 0.0.40
codegen_flags: <defaults>
</compile_context>

<pallas_src>
import jax
import jax.numpy as jnp
from jax.experimental import pallas as pl
from jax.experimental.pallas import tpu as pltpu

EPS = 1e-5  # BatchNorm2d default eps


def conv_stats_kernel(pt_ref, wt_ref, y_ref, sum_ref, sq_ref):
    """One im2col matmul per tile + partial BN statistics.

    pt_ref:  (Kp, TM)      bf16  im2col patches, pixels in lanes (dense)
    wt_ref:  (Cout, Kp)    bf16  reshaped conv weights (same block every step)
    y_ref:   (Cout, TM)    bf16  conv output tile (lane-dense, half-width store)
    sum_ref: (1, 1, Cout)  f32   per-tile per-channel sum
    sq_ref:  (1, 1, Cout)  f32   per-tile per-channel sum of squares
    """
    acc = jnp.dot(wt_ref[...], pt_ref[...],
                  preferred_element_type=jnp.float32)        # (Cout, TM) on MXU
    y_ref[...] = acc.astype(y_ref.dtype)                     # bf16 writeback
    sum_ref[...] = jnp.sum(acc, axis=1)[None, None, :]       # stats from f32 acc
    sq_ref[...] = jnp.sum(acc * acc, axis=1)[None, None, :]


def bn_relu_kernel(y_ref, scale_ref, shift_ref, o_ref):
    """Fused BN apply + ReLU, writing the NCHW-layout output block directly.

    y_ref: (Cout, TM) bf16, scale/shift: (Cout, 1) f32, o_ref: (1, Cout, TM) f32.
    """
    y = y_ref[...].astype(jnp.float32)
    o_ref[...] = jnp.maximum(y * scale_ref[...] + shift_ref[...], 0.0)[None]


def _pick_tile_pixels(hw, m, k_pad, cout, *,
                      vmem_budget_bytes=24 * 1024 * 1024, min_tiles=8):
    """Largest pixel tile (multiple of 128, dividing H*W so NCHW writeback
    tiles cleanly) that fits the double-buffered VMEM budget; prefer keeping
    >= min_tiles grid steps so v7x's two TensorCores both stay busy."""
    def tile_bytes(tm):
        # double-buffered: patches (bf16) + conv intermediate (bf16, written in
        # phase 1 / read in phase 2) + final f32 output + tiny weight/scale.
        return (2 * k_pad * tm * 2 + 4 * cout * tm * 2 + 2 * cout * tm * 4
                + cout * k_pad * 2)

    cands = [t for t in range(128, hw + 1, 128)
             if hw % t == 0 and tile_bytes(t) <= vmem_budget_bytes]
    if not cands:
        return 128
    big_enough = [t for t in cands if m // t >= min_tiles]
    return max(big_enough) if big_enough else max(cands)


def conv_bn_relu(x_nchw, weight, bias, gamma, beta, *, tile_pixels=None):
    """Fused Conv2d(ks=3, stride=1, pad=1) + BatchNorm2d(train) + ReLU.

    x_nchw: (N, Cin, H, W) f32.  weight: (KH, KW, Cin, Cout) f32.
    bias/gamma/beta: (Cout,) f32.  Returns (N, Cout, H, W) f32.

    The conv bias is accepted but not applied: a constant per-channel bias is
    exactly cancelled by training-mode BatchNorm's mean subtraction.
    """
    del bias  # mathematically a no-op through training-mode BatchNorm
    N, Cin, H, W = x_nchw.shape
    KH, KW, _, Cout = weight.shape
    pad = (KH - 1) // 2
    K = KH * KW * Cin
    K_pad = ((K + 15) // 16) * 16        # unmasked bf16 sublane loads
    HW = H * W
    M = N * HW

    assert HW % 128 == 0, "H*W must be a multiple of 128 (lane-dense tiles)"
    if tile_pixels is None:
        tile_pixels = _pick_tile_pixels(HW, M, K_pad, Cout)
    TM = tile_pixels
    assert TM % 128 == 0 and HW % TM == 0
    tiles_per_img = HW // TM
    num_tiles = N * tiles_per_img

    # ---- wrapper-side layout plumbing (lane-dense operands for the kernels) ----
    # Build the patch matrix directly in (K, M) bf16 orientation: one transpose
    # of the (small) input, cheap shifted slices, no (M, K) f32 materialization.
    # TODO(synk): for large shapes, fuse pad + im2col into phase 1 with halo row
    # BlockSpecs (or manual strip DMA) instead of materializing (K, M) in HBM.
    xt = jnp.transpose(x_nchw, (1, 0, 2, 3)).astype(jnp.bfloat16)   # (Cin,N,H,W)
    xt_pad = jnp.pad(xt, ((0, 0), (0, 0), (pad, pad), (pad, pad)))
    patches_t = jnp.concatenate(
        [xt_pad[:, :, kh:kh + H, kw:kw + W].reshape(Cin, M)
         for kh in range(KH) for kw in range(KW)], axis=0)          # (K, M)
    patches_t = jnp.pad(patches_t, ((0, K_pad - K), (0, 0)))        # (K_pad, M)
    w_t = jnp.pad(weight.reshape(K, Cout).T.astype(jnp.bfloat16),
                  ((0, 0), (0, K_pad - K)))                         # (Cout, K_pad)

    cparams = pltpu.CompilerParams(
        dimension_semantics=("parallel",),        # shard tiles across TCs on v7x
        vmem_limit_bytes=32 * 1024 * 1024,        # explicit scoped-VMEM budget
    )

    # ---- phase 1: conv (single K matmul per tile) + partial statistics ----
    conv_t, tile_sum, tile_sq = pl.pallas_call(
        conv_stats_kernel,
        grid=(num_tiles,),
        in_specs=[
            pl.BlockSpec((K_pad, TM), lambda t: (0, t)),          # patch tile
            pl.BlockSpec((Cout, K_pad), lambda t: (0, 0)),        # weights (tiny)
        ],
        out_specs=[
            pl.BlockSpec((Cout, TM), lambda t: (0, t)),           # bf16 conv out
            pl.BlockSpec((1, 1, Cout), lambda t: (t, 0, 0)),      # per-tile sum
            pl.BlockSpec((1, 1, Cout), lambda t: (t, 0, 0)),      # per-tile sumsq
        ],
        out_shape=[
            jax.ShapeDtypeStruct((Cout, M), jnp.bfloat16),
            jax.ShapeDtypeStruct((num_tiles, 1, Cout), jnp.float32),
            jax.ShapeDtypeStruct((num_tiles, 1, Cout), jnp.float32),
        ],
        compiler_params=cparams,
    )(patches_t, w_t)

    # ---- finalize global batch statistics (tiny, O(num_tiles*Cout)) ----
    ssum = jnp.sum(tile_sum[:, 0, :], axis=0)                     # (Cout,)
    ssq = jnp.sum(tile_sq[:, 0, :], axis=0)                       # (Cout,)
    mean = ssum / M
    var = jnp.maximum(ssq / M - mean * mean, 0.0)                 # clamp cancellation
    scale = gamma * jax.lax.rsqrt(var + EPS)
    shift = beta - mean * scale
    scale_col = scale.reshape(Cout, 1).astype(jnp.float32)
    shift_col = shift.reshape(Cout, 1).astype(jnp.float32)

    # ---- phase 2: fused BN FMA + ReLU, written straight into NCHW layout ----
    out3 = pl.pallas_call(
        bn_relu_kernel,
        grid=(num_tiles,),
        in_specs=[
            pl.BlockSpec((Cout, TM), lambda t: (0, t)),
            pl.BlockSpec((Cout, 1), lambda t: (0, 0)),
            pl.BlockSpec((Cout, 1), lambda t: (0, 0)),
        ],
        out_specs=pl.BlockSpec(
            (1, Cout, TM),
            lambda t: (t // tiles_per_img, 0, t % tiles_per_img)),
        out_shape=jax.ShapeDtypeStruct((N, Cout, HW), jnp.float32),
        compiler_params=cparams,
    )(conv_t, scale_col, shift_col)

    return out3.reshape(N, Cout, H, W)                            # free reshape


if __name__ == "__main__":
    key = jax.random.PRNGKey(0)
    k_x, k_w, k_b = jax.random.split(key, 3)

    N, Cin, H, W = 2, 4, 16, 16
    Cout, KS = 8, 3

    x = jax.random.normal(k_x, (N, Cin, H, W), jnp.float32)

    # Deterministic Conv2d-style init: U(-b, b), b = 1/sqrt(Cin*KS*KS)
    bound = 1.0 / (Cin * KS * KS) ** 0.5
    weight = jax.random.uniform(k_w, (KS, KS, Cin, Cout), jnp.float32,
                                -bound, bound)
    bias = jax.random.uniform(k_b, (Cout,), jnp.float32, -bound, bound)
    gamma = jnp.ones((Cout,), jnp.float32)   # BatchNorm2d.weight init
    beta = jnp.zeros((Cout,), jnp.float32)   # BatchNorm2d.bias init

    out = jax.block_until_ready(conv_bn_relu(x, weight, bias, gamma, beta))

    # Pure-JAX reference with full PyTorch semantics: conv (bf16 operands /
    # f32 accumulation, matching the kernel's MXU precision) + bias,
    # training-mode BN, ReLU.  The bias is applied here (as in PyTorch) to
    # verify it is indeed cancelled by BN.  Tolerance reflects the kernel's
    # bf16 conv intermediate (relative rounding ~2^-9 of pre-BN values).
    ref_conv = jax.lax.conv_general_dilated(
        x.astype(jnp.bfloat16),
        jnp.transpose(weight, (3, 2, 0, 1)).astype(jnp.bfloat16),   # OIHW
        window_strides=(1, 1), padding=((1, 1), (1, 1)),
        dimension_numbers=("NCHW", "OIHW", "NCHW"),
        preferred_element_type=jnp.float32)
    ref_conv = ref_conv + bias[None, :, None, None]
    mean = ref_conv.mean(axis=(0, 2, 3), keepdims=True)
    var = ((ref_conv - mean) ** 2).mean(axis=(0, 2, 3), keepdims=True)
    ref = jnp.maximum(
        (ref_conv - mean) / jnp.sqrt(var + EPS)
        * gamma[None, :, None, None] + beta[None, :, None, None], 0.0)

    assert out.shape == (N, Cout, H, W)
    assert jnp.allclose(out, ref, atol=2e-2, rtol=2e-2), \
        float(jnp.abs(out - ref).max())
    print("KERNEL_OK")
</pallas_src>

<mosaic_0001>
module attributes {stable_mosaic.version = 11 : i64} {
  func.func @conv_stats_kernel(%arg0: i32, %arg1: memref<48x256xbf16, #tpu.memory_space<vmem>>, %arg2: memref<8x48xbf16, #tpu.memory_space<vmem>>, %arg3: memref<8x256xbf16, #tpu.memory_space<vmem>>, %arg4: memref<1x1x8xf32, #tpu.memory_space<vmem>>, %arg5: memref<1x1x8xf32, #tpu.memory_space<vmem>>) attributes {dimension_semantics = [#tpu.dimension_semantics<parallel>], iteration_bounds = array<i64: 2>, scalar_prefetch = 0 : i64, scratch_operands = 0 : i64, tpu.core_type = #tpu.core_type<tc>, window_params = [{transform_indices = @transform_0, window_bounds = array<i64: 48, 256>}, {pipeline_mode = #tpu.pipeline_mode<synchronous>, transform_indices = @transform_1, window_bounds = array<i64: 8, 48>}, {transform_indices = @transform_2, window_bounds = array<i64: 8, 256>}, {transform_indices = @transform_3, window_bounds = array<i64: 1, 1, 8>}, {transform_indices = @transform_4, window_bounds = array<i64: 1, 1, 8>}]} {
    %c0 = arith.constant 0 : index
    %c0_0 = arith.constant 0 : index
    %0 = vector.load %arg2[%c0, %c0_0] : memref<8x48xbf16, #tpu.memory_space<vmem>>, vector<8x48xbf16>
    %c0_1 = arith.constant 0 : index
    %c0_2 = arith.constant 0 : index
    %1 = vector.load %arg1[%c0_1, %c0_2] : memref<48x256xbf16, #tpu.memory_space<vmem>>, vector<48x256xbf16>
    %cst = arith.constant dense<0.000000e+00> : vector<8x256xf32>
    %2 = tpu.matmul %0, %1, %cst {dimension_numbers = #tpu.dot_dimension_numbers<[1], [0], [0], [1], [0, 0, 1, 1], [], []>} : vector<8x48xbf16>, vector<48x256xbf16>, vector<8x256xf32> -> vector<8x256xf32>
    %3 = arith.truncf %2 : vector<8x256xf32> to vector<8x256xbf16>
    %c0_3 = arith.constant 0 : index
    %c0_4 = arith.constant 0 : index
    %4 = vector.load %arg3[%c0_3, %c0_4] : memref<8x256xbf16, #tpu.memory_space<vmem>>, vector<8x256xbf16>
    tpu.vector_store %arg3[%c0_3, %c0_4], %3 {strides = array<i32>} : memref<8x256xbf16, #tpu.memory_space<vmem>>, vector<8x256xbf16>,
    %cst_5 = arith.constant dense<0.000000e+00> : vector<8xf32>
    %5 = vector.multi_reduction <add>, %2, %cst_5 [1] : vector<8x256xf32> to vector<8xf32>
    %6 = vector.shape_cast %5 : vector<8xf32> to vector<1x1x8xf32>
    %c0_6 = arith.constant 0 : index
    %c0_7 = arith.constant 0 : index
    %c0_8 = arith.constant 0 : index
    %7 = vector.load %arg4[%c0_6, %c0_7, %c0_8] : memref<1x1x8xf32, #tpu.memory_space<vmem>>, vector<1x1x8xf32>
    tpu.vector_store %arg4[%c0_6, %c0_7, %c0_8], %6 {strides = array<i32>} : memref<1x1x8xf32, #tpu.memory_space<vmem>>, vector<1x1x8xf32>,
    %8 = arith.mulf %2, %2 : vector<8x256xf32>
    %cst_9 = arith.constant dense<0.000000e+00> : vector<8xf32>
    %9 = vector.multi_reduction <add>, %8, %cst_9 [1] : vector<8x256xf32> to vector<8xf32>
    %10 = vector.shape_cast %9 : vector<8xf32> to vector<1x1x8xf32>
    %c0_10 = arith.constant 0 : index
    %c0_11 = arith.constant 0 : index
    %c0_12 = arith.constant 0 : index
    %11 = vector.load %arg5[%c0_10, %c0_11, %c0_12] : memref<1x1x8xf32, #tpu.memory_space<vmem>>, vector<1x1x8xf32>
    tpu.vector_store %arg5[%c0_10, %c0_11, %c0_12], %10 {strides = array<i32>} : memref<1x1x8xf32, #tpu.memory_space<vmem>>, vector<1x1x8xf32>,
    return
  }
  func.func @transform_0(%arg0: i32) -> (i32, i32) {
    %c0_i32 = arith.constant 0 : i32
    %c0_i32_0 = arith.constant 0 : i32
    return %c0_i32, %arg0 : i32, i32
  }
  func.func @transform_1(%arg0: i32) -> (i32, i32) {
    %c0_i32 = arith.constant 0 : i32
    %c0_i32_0 = arith.constant 0 : i32
    %c0_i32_1 = arith.constant 0 : i32
    return %c0_i32, %c0_i32_0 : i32, i32
  }
  func.func @transform_2(%arg0: i32) -> (i32, i32) {
    %c0_i32 = arith.constant 0 : i32
    %c0_i32_0 = arith.constant 0 : i32
    return %c0_i32, %arg0 : i32, i32
  }
  func.func @transform_3(%arg0: i32) -> (i32, i32, i32) {
    %c0_i32 = arith.constant 0 : i32
    %c0_i32_0 = arith.constant 0 : i32
    %c0_i32_1 = arith.constant 0 : i32
    return %arg0, %c0_i32, %c0_i32_0 : i32, i32, i32
  }
  func.func @transform_4(%arg0: i32) -> (i32, i32, i32) {
    %c0_i32 = arith.constant 0 : i32
    %c0_i32_0 = arith.constant 0 : i32
    %c0_i32_1 = arith.constant 0 : i32
    return %arg0, %c0_i32, %c0_i32_0 : i32, i32, i32
  }
}

</mosaic_0001>

<llo_original>
// kernel: tpu_custom_call.1
$region0: #{tpu_custom_call.1}
  #allocation0 [shape = 'u32[]', space=smem, size = 0x4, offset = 0x4, fixed_abs, tag = 'smem constant byte address 0x4 - core index']
  #allocation1 [shape = 'u32[144,128]{1,0:T(1,128)}', space=vmem, size = 0x12000, scoped, tag = 'internal scratch']
  %s0 = inlined_call_operand.hbm [shape: bf16[48,512], index: 0, kind: input, shape index: {}]
  %s1 = inlined_call_operand.hbm [shape: bf16[8,48], index: 1, kind: input, shape index: {}]
  %s2 = inlined_call_operand.hbm [shape: bf16[8,512], index: 2, kind: output, shape index: {0}]
  %s3 = inlined_call_operand.hbm [shape: f32[2,1,8], index: 3, kind: output, shape index: {1}]
  %s4 = inlined_call_operand.hbm [shape: f32[2,1,8], index: 4, kind: output, shape index: {2}]
  %5 = xla_tuple %s2, %s3, %s4
  %s6 = sld [smem:[#allocation0]]
  $region65: #{tpu_custom_call.1} parent=0
    _
  %s8 = ssub.s32 1, %s6
  %s9 = scalar_select 0, %s8, %s6
  $region1: #{tpu_custom_call.1} parent=0
    #allocation2 [shape = 'u8[49152]{0}', space=vmem, size = 0xc000, scoped, tag = 'input window, operand 0']
    #allocation3 [shape = 's32[2]{0}', space=sflag, size = 0x8, scoped, tag = 'scoped memory for tpu_custom_call.1']
    #allocation4 [shape = 's32[2]{0}', space=sflag, size = 0x8, scoped, tag = 'scoped memory for tpu_custom_call.1']
    #allocation5 [shape = 'u8[2048]{0}', space=vmem, size = 0x800, scoped, tag = 'input window, operand 1, single buffered']
    #allocation6 [shape = 's32[1]{0}', space=sflag, size = 0x4, scoped, tag = 'scoped memory for tpu_custom_call.1']
    #allocation7 [shape = 'u8[8192]{0}', space=vmem, size = 0x2000, scoped, tag = 'output window, operand 0']
    #allocation8 [shape = 'u8[1024]{0}', space=vmem, size = 0x400, scoped, tag = 'output window, operand 1']
    #allocation9 [shape = 's32[2]{0}', space=sflag, size = 0x8, scoped, tag = 'scoped memory for tpu_custom_call.1']
    #allocation10 [shape = 'u8[1024]{0}', space=vmem, size = 0x400, scoped, tag = 'output window, operand 2']
    %10 = vsyncpa [#allocation3], 0
    %s11 = scalar_lea.sflag [#allocation3], 1
    %12 = vsyncpa %s11, 0
    %13 = vsyncpa [#allocation6], 0
    %14 = vsyncpa [#allocation4], 0
    %s15 = scalar_lea.sflag [#allocation4], 1
    %16 = vsyncpa %s15, 0
    %17 = vsyncpa [#allocation9], 0
    %s18 = scalar_lea.sflag [#allocation9], 1
    %19 = vsyncpa %s18, 0
    loop: start=0, step=1, limit=4
    $region2: #{tpu_custom_call.1} parent=1 // loop_pre_header
      _
    $region3: #{tpu_custom_call.1} parent=1 // loop_header
      %s21 = sphi 0, %s25
      %p22 = scmp.ge.s32.totalorder %s21, 4
      %s31 = sphi 0, %s33
      %s34 = sphi 0, %s31
      %s35 = sphi 0, %s34
      %s51 = sphi 0, %s35
      %s55 = sphi 0, %s55
      %s57 = sphi 0, %s55
      %s58 = sphi 0, %s57
      %s72 = sphi 0, %s58
      %s78 = sphi 0, %s80
      %s81 = sphi 0, %s78
      %s82 = sphi 0, %s81
      %s98 = sphi 0, %s82
      %s104 = sphi 0, %s106
      %s107 = sphi 0, %s104
      %s108 = sphi 0, %s107
      %s124 = sphi 0, %s108
      %s130 = sphi 0, %s132
      %s133 = sphi 0, %s130
      %s134 = sphi 0, %s133
      %s150 = sphi 0, %s134
    $region4: #{tpu_custom_call.1} parent=1 // loop_header_branch
      %24 = sbr.rel (%p22) target = $region8
    $region5: #{tpu_custom_call.1} parent=1 // loop_body
      %s26 = ssub.s32 %s21, 1
      %s27 = ssub.s32 %s21, 2
      %s28 = sadd.s32 %s21, 1
      %s29 = ssub.s32 %s21, %s28
      %p30 = scmp.eq.s32.totalorder %s29, 0
      %s32 = sadd.s32 %s31, 1
      %s33 = scalar_select %p30, %s31, %s32
      %p36 = pneg %p30
      %p37 = scmp.eq.s32.totalorder %s21, 1
      %p38 = por %p36, %p37
      %p39 = scmp.ne.s32.totalorder %s31, %s34
      %p40 = scmp.eq.s32.totalorder %s21, 0
      %p41 = por %p39, %p40
      %p42 = scmp.ne.s32.totalorder %s31, %s34
      %p43 = scmp.eq.s32.totalorder %s26, 1
      %p44 = por %p42, %p43
      %p45 = scmp.ne.s32.totalorder %s34, %s35
      %p46 = scmp.eq.s32.totalorder %s26, 0
      %p47 = por %p45, %p46
      %p48 = scmp.ne.s32.totalorder %s34, %s35
      %p49 = scmp.eq.s32.totalorder %s27, 1
      %p50 = por %p48, %p49
      %p52 = scmp.ne.s32.totalorder %s35, %s51
      %p53 = scmp.eq.s32.totalorder %s27, 0
      %p54 = por %p52, %p53
      %s56 = sadd.s32 %s55, 1
      %p59 = scmp.eq.s32.totalorder %s21, 1
      %p60 = scmp.ne.s32.totalorder %s55, %s57
      %p61 = scmp.eq.s32.totalorder %s21, 0
      %p62 = por %p60, %p61
      %p63 = scmp.ne.s32.totalorder %s55, %s57
      %p64 = scmp.eq.s32.totalorder %s26, 1
      %p65 = por %p63, %p64
      %p66 = scmp.ne.s32.totalorder %s57, %s58
      %p67 = scmp.eq.s32.totalorder %s26, 0
      %p68 = por %p66, %p67
      %p69 = scmp.ne.s32.totalorder %s57, %s58
      %p70 = scmp.eq.s32.totalorder %s27, 1
      %p71 = por %p69, %p70
      %p73 = scmp.ne.s32.totalorder %s58, %s72
      %p74 = scmp.eq.s32.totalorder %s27, 0
      %p75 = por %p73, %p74
      %s76 = ssub.s32 %s21, %s28
      %p77 = scmp.eq.s32.totalorder %s76, 0
      %s79 = sadd.s32 %s78, 1
      %s80 = scalar_select %p77, %s78, %s79
      %p83 = pneg %p77
      %p84 = scmp.eq.s32.totalorder %s21, 1
      %p85 = por %p83, %p84
      %p86 = scmp.ne.s32.totalorder %s78, %s81
      %p87 = scmp.eq.s32.totalorder %s21, 0
      %p88 = por %p86, %p87
      %p89 = scmp.ne.s32.totalorder %s78, %s81
      %p90 = scmp.eq.s32.totalorder %s26, 1
      %p91 = por %p89, %p90
      %p92 = scmp.ne.s32.totalorder %s81, %s82
      %p93 = scmp.eq.s32.totalorder %s26, 0
      %p94 = por %p92, %p93
      %p95 = scmp.ne.s32.totalorder %s81, %s82
      %p96 = scmp.eq.s32.totalorder %s27, 1
      %p97 = por %p95, %p96
      %p99 = scmp.ne.s32.totalorder %s82, %s98
      %p100 = scmp.eq.s32.totalorder %s27, 0
      %p101 = por %p99, %p100
      %s102 = ssub.s32 %s21, %s28
      %p103 = scmp.eq.s32.totalorder %s102, 0
      %s105 = sadd.s32 %s104, 1
      %s106 = scalar_select %p103, %s104, %s105
      %p109 = pneg %p103
      %p110 = scmp.eq.s32.totalorder %s21, 1
      %p111 = por %p109, %p110
      %p112 = scmp.ne.s32.totalorder %s104, %s107
      %p113 = scmp.eq.s32.totalorder %s21, 0
      %p114 = por %p112, %p113
      %p115 = scmp.ne.s32.totalorder %s104, %s107
      %p116 = scmp.eq.s32.totalorder %s26, 1
      %p117 = por %p115, %p116
      %p118 = scmp.ne.s32.totalorder %s107, %s108
      %p119 = scmp.eq.s32.totalorder %s26, 0
      %p120 = por %p118, %p119
      %p121 = scmp.ne.s32.totalorder %s107, %s108
      %p122 = scmp.eq.s32.totalorder %s27, 1
      %p123 = por %p121, %p122
      %p125 = scmp.ne.s32.totalorder %s108, %s124
      %p126 = scmp.eq.s32.totalorder %s27, 0
      %p127 = por %p125, %p126
      %s128 = ssub.s32 %s21, %s28
      %p129 = scmp.eq.s32.totalorder %s128, 0
      %s131 = sadd.s32 %s130, 1
      %s132 = scalar_select %p129, %s130, %s131
      %p135 = pneg %p129
      %p136 = scmp.eq.s32.totalorder %s21, 1
      %p137 = por %p135, %p136
      %p138 = scmp.ne.s32.totalorder %s130, %s133
      %p139 = scmp.eq.s32.totalorder %s21, 0
      %p140 = por %p138, %p139
      %p141 = scmp.ne.s32.totalorder %s130, %s133
      %p142 = scmp.eq.s32.totalorder %s26, 1
      %p143 = por %p141, %p142
      %p144 = scmp.ne.s32.totalorder %s133, %s134
      %p145 = scmp.eq.s32.totalorder %s26, 0
      %p146 = por %p144, %p145
      %p147 = scmp.ne.s32.totalorder %s133, %s134
      %p148 = scmp.eq.s32.totalorder %s27, 1
      %p149 = por %p147, %p148
      %p151 = scmp.ne.s32.totalorder %s134, %s150
      %p152 = scmp.eq.s32.totalorder %s27, 0
      %p153 = por %p151, %p152
      %p154 = scmp.le.s32.totalorder 1, %s21
      %p155 = scmp.lt.s32.totalorder %s21, 3
      %p156 = pnand %p154, %p155
      %p157 = pneg %p156
      // Predicated region
      $region9: #{tpu_custom_call.1} parent=5 // pred_check
        _
      $region10: #{tpu_custom_call.1} parent=5 // pred_check_branch
        %159 = sbr.rel (%p156) target = $region12
      $region11: #{tpu_custom_call.1} parent=5 // pred_region
        %s160 = ssub.s32 %s21, 1
        // Predicated region
        $region13: #{tpu_custom_call.1} parent=11 // pred_check
          %p161 = pneg %p68
        $region14: #{tpu_custom_call.1} parent=11 // pred_check_branch
          %163 = sbr.rel (%p161) target = $region16
        $region15: #{tpu_custom_call.1} parent=11 // pred_region
          %s165 = ssub.s32 64, 64
          %166 = vsyncadd [#allocation6], %s165
          %s168 = sshll.u32 [#allocation5], 4
          %s169 = int_to_ptr.vmem [resolvable:$true] %s168
          %171 = dma.hbm_to_vmem [thread:$0]  %s1, 64, %s169, [#allocation6]
        $region16: #{tpu_custom_call.1} parent=11 // pred_fallthru
          _
      $region12: #{tpu_custom_call.1} parent=5 // pred_fallthru
        _
      %p172 = scmp.lt.s32.totalorder %s21, 2
      // Predicated region
      $region17: #{tpu_custom_call.1} parent=5 // pred_check
        %p173 = pneg %p172
      $region18: #{tpu_custom_call.1} parent=5 // pred_check_branch
        %175 = sbr.rel (%p173) target = $region20
      $region19: #{tpu_custom_call.1} parent=5 // pred_region
        // Predicated region
        $region21: #{tpu_custom_call.1} parent=19 // pred_check
          %p176 = pneg %p41
        $region22: #{tpu_custom_call.1} parent=19 // pred_check_branch
          %178 = sbr.rel (%p176) target = $region24
        $region23: #{tpu_custom_call.1} parent=19 // pred_region
          %s179 = sand.u32 %s31, 1
          %s180 = scalar_lea.sflag [#allocation3], %s179
          %s181 = sand.u32 %s31, 1
          %s182 = smul.addr %s181, 48
          %s183 = scalar_lea.vmem [#allocation2], %s182
          %s184 = smul.u32 2, %s21
          %s186 = ssub.s32 768, 768
          %187 = vsyncadd %s180, %s186
          %s188 = smul.addr %s184, 64
          %s189 = scalar_lea.hbm %s0, %s188
          %s190 = sshll.u32 %s183, 4
          %s191 = int_to_ptr.vmem [resolvable:$true] %s190
          %196 = dma.hbm_to_vmem [thread:$0]  %s189, 768, %s191, %s180, 256, 128, 8
        $region24: #{tpu_custom_call.1} parent=19 // pred_fallthru
          _
      $region20: #{tpu_custom_call.1} parent=5 // pred_fallthru
        _
      %p197 = scmp.le.s32.totalorder 1, %s21
      %p198 = scmp.lt.s32.totalorder %s21, 3
      %p199 = pnand %p197, %p198
      %p200 = pneg %p199
      // Predicated region
      $region25: #{tpu_custom_call.1} parent=5 // pred_check
        _
      $region26: #{tpu_custom_call.1} parent=5 // pred_check_branch
        %202 = sbr.rel (%p199) target = $region28
      $region27: #{tpu_custom_call.1} parent=5 // pred_region
        %s203 = ssub.s32 %s21, 1
        %s204 = sand.u32 %s34, 1
        %s205 = scalar_lea.sflag [#allocation3], %s204
        %s206 = sand.u32 %s34, 1
        %s207 = smul.addr %s206, 48
        %s208 = scalar_lea.vmem [#allocation2], %s207
        // Predicated region
        $region29: #{tpu_custom_call.1} parent=27 // pred_check
          %p209 = pneg %p47
        $region30: #{tpu_custom_call.1} parent=27 // pred_check_branch
          %211 = sbr.rel (%p209) target = $region32
        $region31: #{tpu_custom_call.1} parent=27 // pred_region
          %212 = dma.done %s205, 768
        $region32: #{tpu_custom_call.1} parent=27 // pred_fallthru
          _
        // Predicated region
        $region33: #{tpu_custom_call.1} parent=27 // pred_check
          %p213 = pneg %p68
        $region34: #{tpu_custom_call.1} parent=27 // pred_check_branch
          %215 = sbr.rel (%p213) target = $region36
        $region35: #{tpu_custom_call.1} parent=27 // pred_region
          %216 = dma.done [#allocation6], 64
        $region36: #{tpu_custom_call.1} parent=27 // pred_fallthru
          _
        %s217 = sand.u32 %s34, 1
        %s218 = scalar_lea.sflag [#allocation3], %s217
        %s219 = sand.u32 %s34, 1
        %s220 = smul.addr %s219, 48
        %s221 = scalar_lea.vmem [#allocation2], %s220
        %p222 = pneg %p47
        %p223 = pneg %p44
        %p224 = pneg %p68
        %p225 = pneg %p65
        %p226 = pneg %p94
        %p227 = pneg %p91
        %s228 = sand.u32 %s81, 1
        %s229 = scalar_lea.sflag [#allocation4], %s228
        %s230 = sand.u32 %s81, 1
        %s231 = smul.addr %s230, 8
        %s232 = scalar_lea.vmem [#allocation7], %s231
        %p233 = pneg %p120
        %p234 = pneg %p117
        %s235 = sand.u32 %s26, 1
        %s236 = scalar_lea.sflag [#allocation9], %s235
        %s237 = sand.u32 %s107, 1
        %s238 = scalar_lea.vmem [#allocation8], %s237
        %p239 = pneg %p146
        %p240 = pneg %p143
        %s241 = sand.u32 %s26, 1
        %s242 = scalar_lea.sflag [#allocation9], %s241
        %s243 = sand.u32 %s133, 1
        %s244 = scalar_lea.vmem [#allocation10], %s243
        %s245 = smul.u32 2, %s26
        %s246 = smul.u32 2, %s26
        %v248 = vld [vmem:[#allocation5] sm:$0xf]
        %v249 = vld [vmem:[%s208] sm:$0xff]
        %v250 = vld [vmem:[%s208 + $0x8] sm:$0xff]
        %v251 = vld [vmem:[%s208 + $0x10] sm:$0xff]
        %v252 = vld [vmem:[%s208 + $0x18] sm:$0xff]
        %v253 = vld [vmem:[%s208 + $0x20] sm:$0xff]
        %v254 = vld [vmem:[%s208 + $0x28] sm:$0xff]
        %v261 = vunpack.c.l.b16 %v249
        %v262 = vunpack.c.h.b16 %v249
        %v263 = vunpack.c.l.b16 %v250
        %v264 = vunpack.c.h.b16 %v250
        %v265 = vunpack.c.l.b16 %v251
        %v266 = vunpack.c.h.b16 %v251
        %v267 = vunpack.c.l.b16 %v252
        %v268 = vunpack.c.h.b16 %v252
        %v269 = vunpack.c.l.b16 %v253
        %v270 = vunpack.c.h.b16 %v253
        %v271 = vunpack.c.l.b16 %v254
        %v272 = vunpack.c.h.b16 %v254
        %v273 = vpack.c.b16 %v263, %v261
        %v274 = vpack.c.b16 %v264, %v262
        %v275 = vpack.c.b16 %v267, %v265
        %v276 = vpack.c.b16 %v268, %v266
        %v277 = vpack.c.b16 %v271, %v269
        %v278 = vpack.c.b16 %v272, %v270
        %vm285 = vcmask 392192
        %v287 = vsel %vm285, %v248, 0
        %289 = vmatprep.subr.bf16.mxu0 0
        %290 = vmatpush1.bf16.msra.mxu0 0
        %291 = vmatprep.subr.bf16.mxu0 0
        %292 = vmatpush1.bf16.msra.mxu0 0
        %293 = vmatprep.subr.bf16.mxu0 0
        %294 = vmatpush1.bf16.msra.mxu0 0
        %295 = vmatprep.subr.bf16.mxu0 0
        %296 = vmatpush1.bf16.msra.mxu0 0
        %297 = vmatprep.subr.bf16.mxu0 0
        %298 = vmatpush1.bf16.msra.mxu0 0
        %299 = vmatprep.subr.bf16.mxu0 %v278
        %300 = vmatpush1.bf16.msra.mxu0 %v277
        %301 = vmatprep.subr.bf16.mxu0 %v276
        %302 = vmatpush1.bf16.msra.mxu0 %v275
        %303 = vmatprep.subr.bf16.mxu0 %v274
        %304 = vmatpush1.bf16.msra.mxu0 %v273
        %305 = vmatprep.subr.bf16.mxu0 0
        %306 = vmatpush2.bf16.msra.mxu0 0
        %307 = vmatprep.subr.bf16.mxu0 0
        %308 = vmatpush2.bf16.msra.mxu0 0
        %309 = vmatprep.subr.bf16.mxu0 0
        %310 = vmatpush2.bf16.msra.mxu0 0
        %311 = vmatprep.subr.bf16.mxu0 0
        %312 = vmatpush2.bf16.msra.mxu0 0
        %313 = vmatprep.subr.bf16.mxu0 0
        %314 = vmatpush2.bf16.msra.mxu0 0
        %315 = vmatprep.subr.bf16.mxu0 0
        %316 = vmatpush2.bf16.msra.mxu0 0
        %317 = vmatprep.subr.bf16.mxu0 0
        %318 = vmatpush2.bf16.msra.mxu0 0
        %319 = vmatprep.subr.bf16.mxu0 0
        %320 = vmatpush2.bf16.msra.mxu0 0
        %321 = vmatprep.mubr.bf16.mxu0 0
        %322 = vmatmul.mubr.bf16.gmra.mxu0 %v287
        %v323 = vpop.f32.mrf.mxu0
        %v324 = vadd.f32 0.0, %v323
        %v325 = vpop.f32.mrf.mxu0
        %v326 = vadd.f32 0.0, %v325
        %v327 = vpop.f32.mrf.mxu0
        %v328 = vpop.f32.mrf.mxu0
        %329 = vdwg.mxu0
        %v330 = vpack.c.bf16 %v324, %v324
        %v331 = vpack.c.bf16 %v326, %v326
        %v334 = vunpack.c.l.b16 %v330
        %v335 = vunpack.c.l.b16 %v331
        %v336 = vpack.c.b16 %v335, %v334
        %338 = vst [vmem:[%s232] sm:$0xff] %v336
        %v339 = vadd.f32 %v324, %v326
        %340 = vadd.xlane.f32.xlu0 %v339
        %v341 = vpop.xlane.xlu0 %340
        %v343 = vlaneseq
        %v344 = vand.u32 %v343, 127
        %v345 = vlaneseq
        %v346 = vshrl.u32 %v345, 7
        %v347 = vsub.s32 %v344, %v346
        %v348 = vrot.slane %v341, %v347
        %vm350 = vcmask 57344
        %351 = vst.msk [vmem:[%s238] sm:$0x1] %vm350, %v348
        %v352 = vmul.f32 %v324, %v324
        %v353 = vmul.f32 %v326, %v326
        %v354 = vadd.f32 %v352, %v353
        %355 = vadd.xlane.f32.xlu0 %v354
        %v356 = vpop.xlane.xlu0 %355
        %v358 = vlaneseq
        %v359 = vshrl.u32 %v358, 7
        %v360 = vsub.s32 %v344, %v359
        %v361 = vrot.slane %v356, %v360
        %363 = vst.msk [vmem:[%s244] sm:$0x1] %vm350, %v361
        %s364 = sand.u32 %s81, 1
        %s365 = scalar_lea.sflag [#allocation4], %s364
        %s366 = sand.u32 %s81, 1
        %s367 = smul.addr %s366, 8
        %s368 = scalar_lea.vmem [#allocation7], %s367
        %s369 = sand.u32 %s26, 1
        %s370 = scalar_lea.sflag [#allocation9], %s369
        %s371 = sand.u32 %s107, 1
        %s372 = scalar_lea.vmem [#allocation8], %s371
        %s373 = sand.u32 %s26, 1
        %s374 = scalar_lea.sflag [#allocation9], %s373
        %s375 = sand.u32 %s133, 1
        %s376 = scalar_lea.vmem [#allocation10], %s375
        // Predicated region
        $region37: #{tpu_custom_call.1} parent=27 // pred_check
          %p377 = pneg %p91
        $region38: #{tpu_custom_call.1} parent=27 // pred_check_branch
          %379 = sbr.rel (%p377) target = $region40
        $region39: #{tpu_custom_call.1} parent=27 // pred_region
          %s380 = smul.u32 2, %s26
          %s382 = ssub.s32 128, 128
          %383 = vsyncadd %s365, %s382
          %s384 = smul.addr %s380, 64
          %s385 = scalar_lea.hbm %s2, %s384
          %s387 = sshll.u32 %s368, 4
          %s388 = int_to_ptr.vmem [resolvable:$true] %s387
          %390 = dma.vmem_to_hbm [thread:$0]  %s388, 128, %s385, %s365
        $region40: #{tpu_custom_call.1} parent=27 // pred_fallthru
          _
        // Predicated region
        $region41: #{tpu_custom_call.1} parent=27 // pred_check
          %p391 = pneg %p117
        $region42: #{tpu_custom_call.1} parent=27 // pred_check_branch
          %393 = sbr.rel (%p391) target = $region44
        $region43: #{tpu_custom_call.1} parent=27 // pred_region
          %s395 = ssub.s32 16, 16
          %396 = vsyncadd %s370, %s395
          %s397 = smul.addr %s26, 16
          %s398 = scalar_lea.hbm %s3, %s397
          %s400 = sshll.u32 %s372, 4
          %s401 = int_to_ptr.vmem [resolvable:$true] %s400
          %403 = dma.vmem_to_hbm [thread:$0]  %s401, 16, %s398, %s370
        $region44: #{tpu_custom_call.1} parent=27 // pred_fallthru
          _
        // Predicated region
        $region45: #{tpu_custom_call.1} parent=27 // pred_check
          %p404 = pneg %p143
        $region46: #{tpu_custom_call.1} parent=27 // pred_check_branch
          %406 = sbr.rel (%p404) target = $region48
        $region47: #{tpu_custom_call.1} parent=27 // pred_region
          %s408 = ssub.s32 16, 16
          %409 = vsyncadd %s374, %s408
          %s410 = smul.addr %s26, 16
          %s411 = scalar_lea.hbm %s4, %s410
          %s413 = sshll.u32 %s376, 4
          %s414 = int_to_ptr.vmem [resolvable:$true] %s413
          %416 = dma.vmem_to_hbm [thread:$0]  %s414, 16, %s411, %s374
        $region48: #{tpu_custom_call.1} parent=27 // pred_fallthru
          _
      $region28: #{tpu_custom_call.1} parent=5 // pred_fallthru
        _
      %p417 = scmp.le.s32.totalorder 2, %s21
      // Predicated region
      $region49: #{tpu_custom_call.1} parent=5 // pred_check
        %p418 = pneg %p417
      $region50: #{tpu_custom_call.1} parent=5 // pred_check_branch
        %420 = sbr.rel (%p418) target = $region52
      $region51: #{tpu_custom_call.1} parent=5 // pred_region
        %s421 = ssub.s32 %s21, 2
        // Predicated region
        $region53: #{tpu_custom_call.1} parent=51 // pred_check
          %p422 = pneg %p97
        $region54: #{tpu_custom_call.1} parent=51 // pred_check_branch
          %424 = sbr.rel (%p422) target = $region56
        $region55: #{tpu_custom_call.1} parent=51 // pred_region
          %s425 = sand.u32 %s82, 1
          %s426 = scalar_lea.sflag [#allocation4], %s425
          %s427 = sand.u32 %s82, 1
          %s428 = smul.addr %s427, 8
          %s429 = scalar_lea.vmem [#allocation7], %s428
          %430 = dma.done %s426, 128
        $region56: #{tpu_custom_call.1} parent=51 // pred_fallthru
          _
        // Predicated region
        $region57: #{tpu_custom_call.1} parent=51 // pred_check
          %p431 = pneg %p123
        $region58: #{tpu_custom_call.1} parent=51 // pred_check_branch
          %433 = sbr.rel (%p431) target = $region60
        $region59: #{tpu_custom_call.1} parent=51 // pred_region
          %s434 = sand.u32 %s27, 1
          %s435 = scalar_lea.sflag [#allocation9], %s434
          %s436 = sand.u32 %s108, 1
          %s437 = scalar_lea.vmem [#allocation8], %s436
          %438 = dma.done %s435, 16
        $region60: #{tpu_custom_call.1} parent=51 // pred_fallthru
          _
        // Predicated region
        $region61: #{tpu_custom_call.1} parent=51 // pred_check
          %p439 = pneg %p149
        $region62: #{tpu_custom_call.1} parent=51 // pred_check_branch
          %441 = sbr.rel (%p439) target = $region64
        $region63: #{tpu_custom_call.1} parent=51 // pred_region
          %s442 = sand.u32 %s27, 1
          %s443 = scalar_lea.sflag [#allocation9], %s442
          %s444 = sand.u32 %s134, 1
          %s445 = scalar_lea.vmem [#allocation10], %s444
          %446 = dma.done %s443, 16
        $region64: #{tpu_custom_call.1} parent=51 // pred_fallthru
          _
      $region52: #{tpu_custom_call.1} parent=5 // pred_fallthru
        _
    $region6: #{tpu_custom_call.1} parent=1 // loop_footer
      %s25 = sadd.s32 1, %s21
    $region7: #{tpu_custom_call.1} parent=1 // loop_footer_branch
      %20 = sbr.rel target = $region3
    $region8: #{tpu_custom_call.1} parent=1 // loop_exit
      _
    %447 = vsyncpa [#allocation3], 1
    %s448 = scalar_lea.sflag [#allocation3], 1
    %449 = vsyncpa %s448, 1
    %450 = vsyncpa [#allocation6], 1
    %451 = vsyncpa [#allocation4], 1
    %s452 = scalar_lea.sflag [#allocation4], 1
    %453 = vsyncpa %s452, 1
    %454 = vsyncpa [#allocation9], 1
    %s455 = scalar_lea.sflag [#allocation9], 1
    %456 = vsyncpa %s455, 1

</llo_original>
